<compile_context>
chip_gen: v7x
topology: tpu7x:2x2x1
jax: 0.10.0
libtpu: 0.0.40
codegen_flags: <defaults>
</compile_context>

<pallas_src>
import jax
import jax.numpy as jnp
from jax.experimental import pallas as pl
from jax.experimental.pallas import tpu as pltpu


def _round_up(x: int, m: int) -> int:
    return ((x + m - 1) // m) * m


def _make_ce_kernel(m_total: int, tm: int, n_blocks: int):
    """Cross-entropy-sum kernel over lane-dense (C_pad, TM) logit tiles."""

    def kernel(zT_ref, lbl_ref, out_ref, acc_ref):
        i = pl.program_id(0)

        @pl.when(i == 0)
        def _init():
            acc_ref[0] = jnp.float32(0.0)

        z = zT_ref[...].astype(jnp.float32)      # (C_pad, TM): classes x samples
        lbl = lbl_ref[...]                        # (1, TM) int32 labels

        # numerically stable logsumexp over the class (sublane) axis
        zmax = jnp.max(z, axis=0, keepdims=True)                           # (1, TM)
        lse = jnp.log(jnp.sum(jnp.exp(z - zmax), axis=0, keepdims=True)) + zmax

        # select the target-class logit with iota + where (no gather needed);
        # padded class rows hold a huge negative value and are never selected
        # (labels < C), so they contribute 0.
        row = jax.lax.broadcasted_iota(jnp.int32, z.shape, dimension=0)    # (C_pad, TM)
        z_tgt = jnp.sum(jnp.where(row == lbl, z, 0.0), axis=0, keepdims=True)

        nll = lse - z_tgt                                                  # (1, TM)

        # mask samples beyond the true M (padding of the last tile)
        col = jax.lax.broadcasted_iota(jnp.int32, nll.shape, dimension=1)  # (1, TM)
        valid = (i * tm + col) < m_total
        acc_ref[0] += jnp.sum(jnp.where(valid, nll, 0.0))

        @pl.when(i == n_blocks - 1)
        def _finalize():
            out_ref[0] = acc_ref[0] * jnp.float32(1.0 / m_total)

    return kernel


def _pick_tm(m: int, c_pad: int, itemsize: int) -> int:
    """Tile size over M (lane axis): multiple of 128, sized to a conservative
    VMEM budget that fits v5e/v6e/v7x without raising scoped-VMEM limits."""
    m_pad128 = _round_up(max(m, 1), 128)
    budget = 8 * 1024 * 1024                      # double-buffered inputs budget
    per_col = 2 * (c_pad * itemsize + 4)          # 2x (logit column + int32 label)
    tm = min(budget // per_col, 4096, m_pad128)
    tm = max(128, (tm // 128) * 128)
    return min(tm, m_pad128)


def sup_loss(output, inds_sup, target_scr, *, tm=None):
    """Pallas implementation of SupLoss.forward.

    output:     (N, C) float logits (any float dtype; cast to f32 in-kernel)
    inds_sup:   (M,)   int indices of supervised samples
    target_scr: (N,)   int class labels
    returns scalar float32 loss
    """
    M = int(inds_sup.shape[0])
    N, C = output.shape
    dtype = output.dtype
    itemsize = jnp.dtype(dtype).itemsize

    # ---- JAX glue: row / label gather (== output[inds_sup], target[inds_sup])
    logits = jnp.take(output, inds_sup, axis=0)                     # (M, C), native dtype
    labels = jnp.take(target_scr, inds_sup, axis=0).astype(jnp.int32)  # (M,)

    # ---- lane-dense layout: classes on sublanes, samples on lanes
    c_pad = max(8, _round_up(C, 8))
    if tm is None:
        tm = _pick_tm(M, c_pad, itemsize)
    else:
        tm = max(128, _round_up(int(tm), 128))
    m_pad = _round_up(max(M, 1), tm)
    n_blocks = m_pad // tm

    neg_fill = jnp.asarray(-1e30, dtype)   # exp(pad - max) underflows to 0
    zT = jnp.full((c_pad, m_pad), neg_fill, dtype).at[:C, :M].set(logits.T)
    lbl = jnp.zeros((1, m_pad), jnp.int32).at[0, :M].set(labels)

    cost = pl.CostEstimate(
        flops=5 * M * C,
        transcendentals=M * C,
        bytes_accessed=int(zT.size) * itemsize + int(lbl.size) * 4 + 4,
    )

    out = pl.pallas_call(
        _make_ce_kernel(M, tm, n_blocks),
        out_shape=jax.ShapeDtypeStruct((1,), jnp.float32),
        grid_spec=pltpu.PrefetchScalarGridSpec(
            num_scalar_prefetch=0,
            grid=(n_blocks,),
            in_specs=[
                pl.BlockSpec((c_pad, tm), lambda i: (0, i)),   # logits^T tile
                pl.BlockSpec((1, tm), lambda i: (0, i)),        # labels tile
            ],
            out_specs=pl.BlockSpec(memory_space=pltpu.MemorySpace.SMEM),
            scratch_shapes=[pltpu.SMEM((1,), jnp.float32)],
        ),
        compiler_params=pltpu.CompilerParams(
            dimension_semantics=("arbitrary",),
        ),
        cost_estimate=cost,
    )(zT, lbl)

    # TODO(synk): the XLA-side gather still materializes an (M, C) temp in HBM;
    # a fully fused version would scalar-prefetch inds_sup and DMA rows manually.
    return out[0]


def _reference(output, inds_sup, target_scr):
    z = output[inds_sup].astype(jnp.float32)
    t = target_scr[inds_sup]
    logp = jax.nn.log_softmax(z, axis=-1)
    return -jnp.mean(jnp.take_along_axis(logp, t[:, None], axis=-1))


if __name__ == "__main__":
    # Case 1: small toy shapes matching the original module usage (f32 logits).
    k1, k2, k3 = jax.random.split(jax.random.PRNGKey(0), 3)
    N, C, M = 16, 8, 8
    output = jax.random.normal(k1, (N, C), dtype=jnp.float32)
    target_scr = jax.random.randint(k2, (N,), 0, C, dtype=jnp.int32)
    inds_sup = jax.random.permutation(k3, N)[:M].astype(jnp.int32)

    loss = sup_loss(output, inds_sup, target_scr)
    jax.block_until_ready(loss)
    ref = _reference(output, inds_sup, target_scr)
    assert jnp.allclose(loss, ref, rtol=1e-5, atol=1e-5), (loss, ref)

    # Case 2: bf16 logits, odd C, M not a multiple of the tile -> exercises the
    # multi-step reduction grid, last-tile masking and in-kernel cast.
    k4, k5, k6 = jax.random.split(jax.random.PRNGKey(1), 3)
    N2, C2, M2 = 300, 10, 200
    output2 = jax.random.normal(k4, (N2, C2), dtype=jnp.bfloat16)
    target2 = jax.random.randint(k5, (N2,), 0, C2, dtype=jnp.int32)
    inds2 = jax.random.permutation(k6, N2)[:M2].astype(jnp.int32)

    loss2 = sup_loss(output2, inds2, target2, tm=128)   # force grid=(2,)
    jax.block_until_ready(loss2)
    ref2 = _reference(output2, inds2, target2)
    assert jnp.allclose(loss2, ref2, rtol=1e-4, atol=1e-4), (loss2, ref2)

    print("KERNEL_OK")
</pallas_src>

<mosaic_0001>
module attributes {stable_mosaic.version = 11 : i64} {
  func.func @kernel(%arg0: i32, %arg1: memref<8x128xf32, #tpu.memory_space<vmem>>, %arg2: memref<1x128xi32, #tpu.memory_space<vmem>>, %arg3: memref<1xf32, #tpu.memory_space<smem>>, %arg4: memref<1xf32, #tpu.memory_space<smem>>) attributes {dimension_semantics = [#tpu.dimension_semantics<arbitrary>], iteration_bounds = array<i64: 1>, scalar_prefetch = 0 : i64, scratch_operands = 1 : i64, tpu.core_type = #tpu.core_type<tc>, window_params = [{transform_indices = @transform_0, window_bounds = array<i64: 8, 128>}, {transform_indices = @transform_1, window_bounds = array<i64: 1, 128>}, {transform_indices = @transform_2, window_bounds = array<i64: 1>}]} {
    %c0_i32 = arith.constant 0 : i32
    %0 = arith.cmpi eq, %arg0, %c0_i32 : i32
    %1 = arith.extui %0 : i1 to i32
    %c0_i32_0 = arith.constant 0 : i32
    %2 = arith.cmpi ne, %1, %c0_i32_0 : i32
    scf.if %2 {
      %cst_13 = arith.constant 0.000000e+00 : f32
      %c0_14 = arith.constant 0 : index
      %40 = memref.load %arg4[%c0_14] : memref<1xf32, #tpu.memory_space<smem>>
      memref.store %cst_13, %arg4[%c0_14] : memref<1xf32, #tpu.memory_space<smem>>
    } else {
    }
    %c0 = arith.constant 0 : index
    %c0_1 = arith.constant 0 : index
    %3 = vector.load %arg1[%c0, %c0_1] : memref<8x128xf32, #tpu.memory_space<vmem>>, vector<8x128xf32>
    %c0_2 = arith.constant 0 : index
    %c0_3 = arith.constant 0 : index
    %4 = vector.load %arg2[%c0_2, %c0_3] : memref<1x128xi32, #tpu.memory_space<vmem>>, vector<1x128xi32>
    %cst = arith.constant dense<0xFF800000> : vector<128xf32>
    %5 = vector.multi_reduction <maximumf>, %3, %cst [0] : vector<8x128xf32> to vector<128xf32>
    %6 = vector.shape_cast %5 : vector<128xf32> to vector<1x128xf32>
    %7 = vector.broadcast %6 : vector<1x128xf32> to vector<8x128xf32>
    %8 = arith.subf %3, %7 : vector<8x128xf32>
    %9 = math.exp %8 : vector<8x128xf32>
    %cst_4 = arith.constant dense<0.000000e+00> : vector<128xf32>
    %10 = vector.multi_reduction <add>, %9, %cst_4 [0] : vector<8x128xf32> to vector<128xf32>
    %11 = vector.shape_cast %10 : vector<128xf32> to vector<1x128xf32>
    %12 = math.log %11 : vector<1x128xf32>
    %13 = arith.addf %12, %6 : vector<1x128xf32>
    %14 = tpu.iota {dimensions = array<i32: 0>} : vector<8x128xi32>
    %15 = vector.broadcast %4 : vector<1x128xi32> to vector<8x128xi32>
    %16 = arith.cmpi eq, %14, %15 : vector<8x128xi32>
    %cst_5 = arith.constant 0.000000e+00 : f32
    %17 = vector.broadcast %cst_5 : f32 to vector<8x128xf32>
    %18 = arith.select %16, %3, %17 : vector<8x128xi1>, vector<8x128xf32>
    %cst_6 = arith.constant dense<0.000000e+00> : vector<128xf32>
    %19 = vector.multi_reduction <add>, %18, %cst_6 [0] : vector<8x128xf32> to vector<128xf32>
    %20 = vector.shape_cast %19 : vector<128xf32> to vector<1x128xf32>
    %21 = arith.subf %13, %20 : vector<1x128xf32>
    %22 = tpu.iota {dimensions = array<i32: 1>} : vector<1x128xi32>
    %c128_i32 = arith.constant 128 : i32
    %23 = arith.muli %arg0, %c128_i32 : i32
    %24 = vector.broadcast %23 : i32 to vector<1x128xi32>
    %25 = arith.addi %24, %22 : vector<1x128xi32>
    %c8_i32 = arith.constant 8 : i32
    %26 = vector.broadcast %c8_i32 : i32 to vector<1x128xi32>
    %27 = arith.cmpi slt, %25, %26 : vector<1x128xi32>
    %c0_7 = arith.constant 0 : index
    %28 = memref.load %arg4[%c0_7] : memref<1xf32, #tpu.memory_space<smem>>
    %cst_8 = arith.constant 0.000000e+00 : f32
    %29 = vector.broadcast %cst_8 : f32 to vector<1x128xf32>
    %30 = arith.select %27, %21, %29 : vector<1x128xi1>, vector<1x128xf32>
    %31 = vector.shape_cast %30 : vector<1x128xf32> to vector<1x1x128xf32>
    %cst_9 = arith.constant dense<0.000000e+00> : vector<1xf32>
    %32 = vector.multi_reduction <add>, %31, %cst_9 [1, 2] : vector<1x1x128xf32> to vector<1xf32>
    %33 = vector.shape_cast %32 : vector<1xf32> to vector<1x1x1xf32>
    %34 = vector.extract %33[0, 0, 0] : f32 from vector<1x1x1xf32>
    %35 = arith.addf %28, %34 : f32
    %c0_10 = arith.constant 0 : index
    %36 = memref.load %arg4[%c0_10] : memref<1xf32, #tpu.memory_space<smem>>
    memref.store %35, %arg4[%c0_10] : memref<1xf32, #tpu.memory_space<smem>>
    %c0_i32_11 = arith.constant 0 : i32
    %37 = arith.cmpi eq, %arg0, %c0_i32_11 : i32
    %38 = arith.extui %37 : i1 to i32
    %c0_i32_12 = arith.constant 0 : i32
    %39 = arith.cmpi ne, %38, %c0_i32_12 : i32
    scf.if %39 {
      %c0_13 = arith.constant 0 : index
      %40 = memref.load %arg4[%c0_13] : memref<1xf32, #tpu.memory_space<smem>>
      %cst_14 = arith.constant 1.250000e-01 : f32
      %41 = arith.mulf %40, %cst_14 : f32
      %c0_15 = arith.constant 0 : index
      %42 = memref.load %arg3[%c0_15] : memref<1xf32, #tpu.memory_space<smem>>
      memref.store %41, %arg3[%c0_15] : memref<1xf32, #tpu.memory_space<smem>>
    } else {
    }
    return
  }
  func.func @transform_0(%arg0: i32) -> (i32, i32) {
    %c0_i32 = arith.constant 0 : i32
    %c0_i32_0 = arith.constant 0 : i32
    return %c0_i32, %arg0 : i32, i32
  }
  func.func @transform_1(%arg0: i32) -> (i32, i32) {
    %c0_i32 = arith.constant 0 : i32
    %c0_i32_0 = arith.constant 0 : i32
    return %c0_i32, %arg0 : i32, i32
  }
  func.func @transform_2(%arg0: i32) -> i32 {
    %c0_i32 = arith.constant 0 : i32
    %c0_i32_0 = arith.constant 0 : i32
    return %c0_i32 : i32
  }
}

</mosaic_0001>

<llo_original>
// kernel: tpu_custom_call.1
$region0: #{tpu_custom_call.1}
  #allocation0 [shape = 'u32[]', space=smem, size = 0x4, offset = 0x4, fixed_abs, tag = 'smem constant byte address 0x4 - core index']
  #allocation1 [shape = 'u32[144,128]{1,0:T(1,128)}', space=vmem, size = 0x12000, scoped, tag = 'internal scratch']
  #allocation2 [shape = 'f32[1]{0:T(128)}', space=smem, size = 0x200, scoped, tag = 'scratch operand']
  %s0 = inlined_call_operand.hbm [shape: f32[8,128], index: 0, kind: input, shape index: {}]
  %s1 = inlined_call_operand.vmem [shape: s32[1,128], index: 1, kind: input, shape index: {}]
  %s2 = inlined_call_operand.hbm [shape: f32[1], index: 2, kind: output, shape index: {}]
  %s3 = sld [smem:[#allocation0]]
  $region30: #{tpu_custom_call.1} parent=0
    _
  %s5 = ssub.s32 1, %s3
  %s6 = scalar_select 0, %s5, %s3
  $region1: #{tpu_custom_call.1} parent=0
    #allocation3 [shape = 'u8[4096]{0}', space=vmem, size = 0x1000, scoped, tag = 'input window, operand 0, single buffered']
    #allocation4 [shape = 's32[1]{0}', space=sflag, size = 0x4, scoped, tag = 'scoped memory for tpu_custom_call.1']
    #allocation5 [shape = 's32[1]{0}', space=sflag, size = 0x4, scoped, tag = 'scoped memory for tpu_custom_call.1']
    #allocation6 [shape = 'u8[512]{0}', space=smem, size = 0x200, scoped, tag = 'output window, operand 0, single buffered']
    %7 = vsyncpa [#allocation4], 0
    %8 = vsyncpa [#allocation5], 0
    // Predicated region
    $region2: #{tpu_custom_call.1} parent=1 // pred_check
      _
    $region3: #{tpu_custom_call.1} parent=1 // pred_check_branch
      %10 = sbr.rel (0) target = $region5
    $region4: #{tpu_custom_call.1} parent=1 // pred_region
      %s12 = ssub.s32 128, 128
      %13 = vsyncadd [#allocation4], %s12
      %s15 = sshll.u32 [#allocation3], 4
      %s16 = int_to_ptr.vmem [resolvable:$true] %s15
      %18 = dma.hbm_to_vmem [thread:$0]  %s0, 128, %s16, [#allocation4]
    $region5: #{tpu_custom_call.1} parent=1 // pred_fallthru
      _
    // Predicated region
    $region6: #{tpu_custom_call.1} parent=1 // pred_check
      _
    $region7: #{tpu_custom_call.1} parent=1 // pred_check_branch
      %20 = sbr.rel (0) target = $region9
    $region8: #{tpu_custom_call.1} parent=1 // pred_region
      _
    $region9: #{tpu_custom_call.1} parent=1 // pred_fallthru
      _
    // Predicated region
    $region10: #{tpu_custom_call.1} parent=1 // pred_check
      _
    $region11: #{tpu_custom_call.1} parent=1 // pred_check_branch
      %22 = sbr.rel (0) target = $region13
    $region12: #{tpu_custom_call.1} parent=1 // pred_region
      %23 = dma.done [#allocation4], 128
    $region13: #{tpu_custom_call.1} parent=1 // pred_fallthru
      _
    %p24 = scmp.eq.s32.totalorder 0, 0
    // Predicated region
    $region14: #{tpu_custom_call.1} parent=1 // pred_check
      %p25 = pneg %p24
    $region15: #{tpu_custom_call.1} parent=1 // pred_check_branch
      %27 = sbr.rel (%p25) target = $region17
    $region16: #{tpu_custom_call.1} parent=1 // pred_region
      %s28 = scalar_lea.smem [#allocation2], 0
      %29 = sst [smem:[%s28]] 0.0
    $region17: #{tpu_custom_call.1} parent=1 // pred_fallthru
      _
    %v30 = vld [vmem:[#allocation3] sm:$0xff]
    %v31 = vld [vmem:[%s1] sm:$0x1]
    %v32 = vrot.slane %v30, 4
    %v33 = vmax.f32 %v30, %v32
    %v34 = vrot.slane %v33, 2
    %v35 = vmax.f32 %v33, %v34
    %v36 = vrot.slane %v35, 1
    %v37 = vmax.f32 %v35, %v36
    %v38 = vsub.f32 %v30, %v37
    %v39 = vmul.f32 %v38, 1.442695
    %v40 = vpow.pop %v39
    %v41 = vrot.slane %v40, 4
    %v42 = vadd.f32 %v40, %v41
    %v43 = vrot.slane %v42, 2
    %v44 = vadd.f32 %v42, %v43
    %v45 = vrot.slane %v44, 1
    %v46 = vadd.f32 %v44, %v45
    %v47 = vlog2.pop %v46
    %v48 = vmul.f32 %v47, 0.6931472
    %v49 = vadd.f32 %v48, %v37
    %v50 = vlaneseq
    %v51 = vshrl.u32 %v50, 7
    %v52 = vlaneseq
    %v53 = vshrl.u32 %v52, 7
    %v54 = vsub.s32 0, %v53
    %v55 = vrot.slane %v31, %v54
    %vm56 = vcmp.eq.s32.totalorder %v51, %v55
    %v57 = vsel %vm56, %v30, 0.0
    %v58 = vrot.slane %v57, 4
    %v59 = vadd.f32 %v57, %v58
    %v60 = vrot.slane %v59, 2
    %v61 = vadd.f32 %v59, %v60
    %v62 = vrot.slane %v61, 1
    %v63 = vadd.f32 %v61, %v62
    %v64 = vsub.f32 %v49, %v63
    %v65 = vlaneseq
    %v66 = vand.u32 %v65, 127
    %s67 = smul.u32 0, 128
    %v68 = vstv %s67
    %v69 = vadd.s32 %v68, %v66
    %vm70 = vcmp.lt.s32.totalorder %v69, 8
    %s71 = sld [smem:[#allocation2]]
    %v72 = vsel %vm70, %v64, 0.0
    %vm73 = vcmask 1040384
    %v74 = vsel %vm73, %v72, 0.0
    %75 = vadd.xlane.f32.xlu0 %v74
    %v76 = vpop.xlane.xlu0 %75
    %v77 = vrot.slane %v76, 4
    %v78 = vadd.f32 %v76, %v77
    %v79 = vrot.slane %v78, 2
    %v80 = vadd.f32 %v78, %v79
    %v81 = vrot.slane %v80, 1
    %v82 = vadd.f32 %v80, %v81
    %s83 = vtos %v82
    %s84 = sadd.f32 %s71, %s83
    %s85 = scalar_lea.smem [#allocation2], 0
    %86 = sst [smem:[%s85]] %s84
    // Predicated region
    $region18: #{tpu_custom_call.1} parent=1 // pred_check
      %p87 = pneg %p24
    $region19: #{tpu_custom_call.1} parent=1 // pred_check_branch
      %89 = sbr.rel (%p87) target = $region21
    $region20: #{tpu_custom_call.1} parent=1 // pred_region
      %s90 = sld [smem:[#allocation2]]
      %s91 = smul.f32 %s90, 0.125
      %s92 = scalar_lea.smem [#allocation6], 0
      %93 = sst [smem:[%s92]] %s91
    $region21: #{tpu_custom_call.1} parent=1 // pred_fallthru
      _
    // Predicated region
    $region22: #{tpu_custom_call.1} parent=1 // pred_check
      _
    $region23: #{tpu_custom_call.1} parent=1 // pred_check_branch
      %95 = sbr.rel (0) target = $region25
    $region24: #{tpu_custom_call.1} parent=1 // pred_region
      %s97 = ssub.s32 16, 16
      %98 = vsyncadd [#allocation5], %s97
      %101 = dma.smem_to_hbm [#allocation6], 16, %s2, [#allocation5]
    $region25: #{tpu_custom_call.1} parent=1 // pred_fallthru
      _
    // Predicated region
    $region26: #{tpu_custom_call.1} parent=1 // pred_check
      _
    $region27: #{tpu_custom_call.1} parent=1 // pred_check_branch
      %103 = sbr.rel (0) target = $region29
    $region28: #{tpu_custom_call.1} parent=1 // pred_region
      %104 = dma.done [#allocation5], 16
    $region29: #{tpu_custom_call.1} parent=1 // pred_fallthru
      _
    %105 = sfence
    %106 = vsyncpa [#allocation4], 1
    %107 = vsyncpa [#allocation5], 1

</llo_original>
